<compile_context>
chip_gen: v7x
topology: tpu7x:2x2x1
jax: 0.10.0
libtpu: 0.0.40
codegen_flags: <defaults>
</compile_context>

<pallas_src>
import functools

import jax
import jax.numpy as jnp
from jax.experimental import pallas as pl
from jax.experimental.pallas import tpu as pltpu


# --------------------------------------------------------------------------
# Kernel: one N-tile per grid step.
#   betas_ref : (B, K_pad)      bf16  resident across the whole grid
#   dirs_ref  : (K_pad, TN)     bf16  streamed tile of the flattened shape dirs
#   templ_ref : (1, TN)         f32   streamed tile of the flattened template
#   out_ref   : (B, TN)         f32
# --------------------------------------------------------------------------
def _blend_shape_kernel(betas_ref, dirs_ref, templ_ref, out_ref):
    # bf16 x bf16 -> f32 accumulation on the MXU; no f32 upcast intermediate.
    acc = jnp.dot(
        betas_ref[...],
        dirs_ref[...],
        preferred_element_type=jnp.float32,
    )
    out_ref[...] = (acc + templ_ref[...]).astype(out_ref.dtype)


def prepare_blend_shape_params(shape_dirs: jax.Array,
                               v_template: jax.Array,
                               tile_n: int):
    """One-time (model-build-time) layout + dtype prep.

    shape_dirs : (V, 3, K) f32  ->  (K_pad, N_pad) bf16, lane-dense on N,
                                     K padded to a multiple of 16 (sublanes)
    v_template : (V, 3)    f32  ->  (1, N_pad) f32
    Returns (dirs_kn_bf16, templ_1n_f32, N) where N = V*3 (unpadded).
    """
    V, three, K = shape_dirs.shape
    assert three == 3
    N = V * 3
    k_pad = pl.cdiv(K, 16) * 16                       # bf16 sublane packing
    n_pad = pl.cdiv(N, tile_n) * tile_n               # tile_n is a multiple of 128

    dirs_kn = jnp.transpose(shape_dirs.reshape(N, K))             # (K, N)
    dirs_kn = jnp.pad(dirs_kn, ((0, k_pad - K), (0, n_pad - N)))  # (K_pad, N_pad)
    dirs_kn = dirs_kn.astype(jnp.bfloat16)                        # halve HBM bytes

    templ_1n = jnp.pad(v_template.reshape(1, N).astype(jnp.float32),
                       ((0, 0), (0, n_pad - N)))

    return dirs_kn, templ_1n, N


@functools.partial(jax.jit, static_argnames=("n", "tile_n"))
def blend_shapes(betas: jax.Array,
                 dirs_kn: jax.Array,
                 templ_1n: jax.Array,
                 *, n: int, tile_n: int) -> jax.Array:
    """Hot path: verts = v_template + shape_dirs @ betas.  Returns (B, V, 3)."""
    B, K = betas.shape
    k_pad, n_pad = dirs_kn.shape
    assert k_pad >= K and n_pad % tile_n == 0 and tile_n % 128 == 0
    num_tiles = n_pad // tile_n

    # Tiny (B, K) array: pad K to match dirs, cast to bf16 once (wrapper-side).
    betas_b = jnp.pad(betas, ((0, 0), (0, k_pad - K))).astype(jnp.bfloat16)

    # Honest byte/flop counts for XLA's scheduler (bf16 dirs+betas, f32 out).
    cost = pl.CostEstimate(
        flops=2 * B * k_pad * n_pad,
        transcendentals=0,
        bytes_accessed=(2 * k_pad * n_pad        # bf16 dirs stream
                        + 2 * B * k_pad          # bf16 betas (resident)
                        + 4 * n_pad              # f32 template
                        + 4 * B * n_pad),        # f32 output
    )

    # Scoped-VMEM budget from the actual double-buffered working set:
    #   2x dirs tile (bf16) + 2x out tile (f32) + 2x template tile (f32)
    #   + resident betas (bf16), plus headroom.  Defaults: 16 MiB v5e,
    #   32 MiB v6e/v7x scoped (v7x physical 64 MiB), so declare explicitly.
    vmem_needed = (2 * (k_pad * tile_n * 2)
                   + 2 * (B * tile_n * 4)
                   + 2 * (tile_n * 4)
                   + B * k_pad * 2)
    vmem_limit = int(min(max(vmem_needed + (4 << 20), 16 << 20), 64 << 20))

    out_flat = pl.pallas_call(
        _blend_shape_kernel,
        out_shape=jax.ShapeDtypeStruct((B, n_pad), jnp.float32),
        grid_spec=pltpu.PrefetchScalarGridSpec(
            num_scalar_prefetch=0,
            grid=(num_tiles,),
            in_specs=[
                pl.BlockSpec((B, k_pad), lambda j: (0, 0)),      # betas: resident
                pl.BlockSpec((k_pad, tile_n), lambda j: (0, j)), # dirs: streamed
                pl.BlockSpec((1, tile_n), lambda j: (0, j)),     # template: streamed
            ],
            out_specs=pl.BlockSpec((B, tile_n), lambda j: (0, j)),
        ),
        compiler_params=pltpu.CompilerParams(
            # Independent N tiles: lets v7x's 2 TensorCores split the stream.
            # (Pick tile_n so num_tiles is even at real sizes, e.g. 4096 -> 8.)
            dimension_semantics=("parallel",),
            vmem_limit_bytes=vmem_limit,
        ),
        cost_estimate=cost,
    )(betas_b, dirs_kn, templ_1n)

    V = n // 3
    return out_flat[:, :n].reshape(B, V, 3)


def build_model_data(betas: jax.Array,
                     shape_dirs: jax.Array,
                     v_template: jax.Array,
                     *, tile_n: int = 4096) -> jax.Array:
    """Convenience wrapper: prepare (normally done once) + hot-path call.

    tile_n=4096 gives 8 even grid steps at real SMPL-X sizes (N~31.5K), near
    the HBM roofline on v5e/v6e/v7x; sweep 2048-8192 (vmem_limit_bytes is set
    from the working set, so 8192 also fits after the bf16-only change).
    """
    V, three, _ = shape_dirs.shape
    assert three == 3
    n = V * 3
    # Clamp so tiny models are not padded out to a huge single tile.
    eff_tile = min(tile_n, pl.cdiv(n, 128) * 128)
    dirs_kn, templ_1n, n = prepare_blend_shape_params(shape_dirs, v_template, eff_tile)
    return blend_shapes(betas, dirs_kn, templ_1n, n=n, tile_n=eff_tile)


if __name__ == "__main__":
    # Deterministic synthetic parameters / inputs (no checkpoint loading).
    key = jax.random.PRNGKey(0)
    k_betas, k_dirs, k_templ = jax.random.split(key, 3)

    B = 8      # batch of shape-coefficient vectors
    K = 16     # number of shape blend coefficients (betas)
    V = 345    # vertices; N = 1035 is NOT a multiple of 128 -> exercises padding
    TILE_N = 512   # small tile at toy sizes -> 3-step grid exercises pipelining

    betas = jax.random.normal(k_betas, (B, K), dtype=jnp.float32)
    shape_dirs = 0.01 * jax.random.normal(k_dirs, (V, 3, K), dtype=jnp.float32)
    v_template = jax.random.normal(k_templ, (V, 3), dtype=jnp.float32)

    verts = build_model_data(betas, shape_dirs, v_template, tile_n=TILE_N)
    verts = jax.block_until_ready(verts)

    # Pure-JAX f32 reference of the hot path; tolerance covers the bf16
    # storage of dirs/betas (accumulation stays f32 in the kernel).
    ref = v_template[None] + jnp.einsum("vdk,bk->bvd", shape_dirs, betas)
    assert verts.shape == (B, V, 3)
    assert jnp.allclose(verts, ref, atol=1e-2, rtol=1e-2)

    print("KERNEL_OK")
</pallas_src>

<mosaic_0001>
module attributes {stable_mosaic.version = 11 : i64} {
  func.func @_blend_shape_kernel(%arg0: i32, %arg1: memref<8x16xbf16, #tpu.memory_space<vmem>>, %arg2: memref<16x512xbf16, #tpu.memory_space<vmem>>, %arg3: memref<1x512xf32, #tpu.memory_space<vmem>>, %arg4: memref<8x512xf32, #tpu.memory_space<vmem>>) attributes {dimension_semantics = [#tpu.dimension_semantics<parallel>], iteration_bounds = array<i64: 3>, scalar_prefetch = 0 : i64, scratch_operands = 0 : i64, tpu.core_type = #tpu.core_type<tc>, window_params = [{pipeline_mode = #tpu.pipeline_mode<synchronous>, transform_indices = @transform_0, window_bounds = array<i64: 8, 16>}, {transform_indices = @transform_1, window_bounds = array<i64: 16, 512>}, {transform_indices = @transform_2, window_bounds = array<i64: 1, 512>}, {transform_indices = @transform_3, window_bounds = array<i64: 8, 512>}]} {
    %c0 = arith.constant 0 : index
    %c0_0 = arith.constant 0 : index
    %0 = vector.load %arg1[%c0, %c0_0] : memref<8x16xbf16, #tpu.memory_space<vmem>>, vector<8x16xbf16>
    %c0_1 = arith.constant 0 : index
    %c0_2 = arith.constant 0 : index
    %1 = vector.load %arg2[%c0_1, %c0_2] : memref<16x512xbf16, #tpu.memory_space<vmem>>, vector<16x512xbf16>
    %cst = arith.constant dense<0.000000e+00> : vector<8x512xf32>
    %2 = tpu.matmul %0, %1, %cst {dimension_numbers = #tpu.dot_dimension_numbers<[1], [0], [0], [1], [0, 0, 1, 1], [], []>} : vector<8x16xbf16>, vector<16x512xbf16>, vector<8x512xf32> -> vector<8x512xf32>
    %c0_3 = arith.constant 0 : index
    %c0_4 = arith.constant 0 : index
    %3 = vector.load %arg3[%c0_3, %c0_4] : memref<1x512xf32, #tpu.memory_space<vmem>>, vector<1x512xf32>
    %4 = vector.broadcast %3 : vector<1x512xf32> to vector<8x512xf32>
    %5 = arith.addf %2, %4 : vector<8x512xf32>
    %c0_5 = arith.constant 0 : index
    %c0_6 = arith.constant 0 : index
    %6 = vector.load %arg4[%c0_5, %c0_6] : memref<8x512xf32, #tpu.memory_space<vmem>>, vector<8x512xf32>
    tpu.vector_store %arg4[%c0_5, %c0_6], %5 {strides = array<i32>} : memref<8x512xf32, #tpu.memory_space<vmem>>, vector<8x512xf32>,
    return
  }
  func.func @transform_0(%arg0: i32) -> (i32, i32) {
    %c0_i32 = arith.constant 0 : i32
    %c0_i32_0 = arith.constant 0 : i32
    %c0_i32_1 = arith.constant 0 : i32
    return %c0_i32, %c0_i32_0 : i32, i32
  }
  func.func @transform_1(%arg0: i32) -> (i32, i32) {
    %c0_i32 = arith.constant 0 : i32
    %c0_i32_0 = arith.constant 0 : i32
    return %c0_i32, %arg0 : i32, i32
  }
  func.func @transform_2(%arg0: i32) -> (i32, i32) {
    %c0_i32 = arith.constant 0 : i32
    %c0_i32_0 = arith.constant 0 : i32
    return %c0_i32, %arg0 : i32, i32
  }
  func.func @transform_3(%arg0: i32) -> (i32, i32) {
    %c0_i32 = arith.constant 0 : i32
    %c0_i32_0 = arith.constant 0 : i32
    return %c0_i32, %arg0 : i32, i32
  }
}

</mosaic_0001>

<llo_original>
// kernel: blend_shapes.1
$region0: #{blend_shapes.1}
  #allocation0 [shape = 'u32[]', space=smem, size = 0x4, offset = 0x4, fixed_abs, tag = 'smem constant byte address 0x4 - core index']
  #allocation1 [shape = 'u32[144,128]{1,0:T(1,128)}', space=vmem, size = 0x12000, scoped, tag = 'internal scratch']
  %s0 = inlined_call_operand.vmem [shape: bf16[8,16], index: 0, kind: input, shape index: {}]
  %s1 = inlined_call_operand.hbm [shape: bf16[16,1536], index: 1, kind: input, shape index: {}]
  %s2 = inlined_call_operand.vmem [shape: f32[1,1536], index: 2, kind: input, shape index: {}]
  %s3 = inlined_call_operand.vmem [shape: f32[8,1536], index: 3, kind: output, shape index: {}]
  %s4 = sld [smem:[#allocation0]]
  $region49: #{blend_shapes.1} parent=0
    _
  %s6 = ssub.s32 1, %s4
  %s7 = scalar_select 0, %s6, %s4
  $region1: #{blend_shapes.1} parent=0
    #allocation2 [shape = 'u8[32768]{0}', space=vmem, size = 0x8000, scoped, tag = 'input window, operand 1']
    #allocation3 [shape = 's32[2]{0}', space=sflag, size = 0x8, scoped, tag = 'scoped memory for blend_shapes.1']
    %8 = vsyncpa [#allocation3], 0
    %s9 = scalar_lea.sflag [#allocation3], 1
    %10 = vsyncpa %s9, 0
    loop: start=0, step=1, limit=5
    $region2: #{blend_shapes.1} parent=1 // loop_pre_header
      _
    $region3: #{blend_shapes.1} parent=1 // loop_header
      %s12 = sphi 0, %s16
      %p13 = scmp.ge.s32.totalorder %s12, 5
      %s20 = sphi 0, %s20
      %s22 = sphi 0, %s20
      %s23 = sphi 0, %s22
      %s37 = sphi 0, %s23
      %s43 = sphi 0, %s45
      %s46 = sphi 0, %s43
      %s47 = sphi 0, %s46
      %s63 = sphi 0, %s47
      %s69 = sphi 0, %s71
      %s72 = sphi 0, %s69
      %s73 = sphi 0, %s72
      %s89 = sphi 0, %s73
      %s95 = sphi 0, %s97
      %s98 = sphi 0, %s95
      %s99 = sphi 0, %s98
      %s115 = sphi 0, %s99
    $region4: #{blend_shapes.1} parent=1 // loop_header_branch
      %15 = sbr.rel (%p13) target = $region8
    $region5: #{blend_shapes.1} parent=1 // loop_body
      %s17 = ssub.s32 %s12, 1
      %s18 = ssub.s32 %s12, 2
      %s19 = sadd.s32 %s12, 1
      %s21 = sadd.s32 %s20, 1
      %p24 = scmp.eq.s32.totalorder %s12, 2
      %p25 = scmp.ne.s32.totalorder %s20, %s22
      %p26 = scmp.eq.s32.totalorder %s12, 0
      %p27 = por %p25, %p26
      %p28 = scmp.ne.s32.totalorder %s20, %s22
      %p29 = scmp.eq.s32.totalorder %s17, 2
      %p30 = por %p28, %p29
      %p31 = scmp.ne.s32.totalorder %s22, %s23
      %p32 = scmp.eq.s32.totalorder %s17, 0
      %p33 = por %p31, %p32
      %p34 = scmp.ne.s32.totalorder %s22, %s23
      %p35 = scmp.eq.s32.totalorder %s18, 2
      %p36 = por %p34, %p35
      %p38 = scmp.ne.s32.totalorder %s23, %s37
      %p39 = scmp.eq.s32.totalorder %s18, 0
      %p40 = por %p38, %p39
      %s41 = ssub.s32 %s12, %s19
      %p42 = scmp.eq.s32.totalorder %s41, 0
      %s44 = sadd.s32 %s43, 1
      %s45 = scalar_select %p42, %s43, %s44
      %p48 = pneg %p42
      %p49 = scmp.eq.s32.totalorder %s12, 2
      %p50 = por %p48, %p49
      %p51 = scmp.ne.s32.totalorder %s43, %s46
      %p52 = scmp.eq.s32.totalorder %s12, 0
      %p53 = por %p51, %p52
      %p54 = scmp.ne.s32.totalorder %s43, %s46
      %p55 = scmp.eq.s32.totalorder %s17, 2
      %p56 = por %p54, %p55
      %p57 = scmp.ne.s32.totalorder %s46, %s47
      %p58 = scmp.eq.s32.totalorder %s17, 0
      %p59 = por %p57, %p58
      %p60 = scmp.ne.s32.totalorder %s46, %s47
      %p61 = scmp.eq.s32.totalorder %s18, 2
      %p62 = por %p60, %p61
      %p64 = scmp.ne.s32.totalorder %s47, %s63
      %p65 = scmp.eq.s32.totalorder %s18, 0
      %p66 = por %p64, %p65
      %s67 = ssub.s32 %s12, %s19
      %p68 = scmp.eq.s32.totalorder %s67, 0
      %s70 = sadd.s32 %s69, 1
      %s71 = scalar_select %p68, %s69, %s70
      %p74 = pneg %p68
      %p75 = scmp.eq.s32.totalorder %s12, 2
      %p76 = por %p74, %p75
      %p77 = scmp.ne.s32.totalorder %s69, %s72
      %p78 = scmp.eq.s32.totalorder %s12, 0
      %p79 = por %p77, %p78
      %p80 = scmp.ne.s32.totalorder %s69, %s72
      %p81 = scmp.eq.s32.totalorder %s17, 2
      %p82 = por %p80, %p81
      %p83 = scmp.ne.s32.totalorder %s72, %s73
      %p84 = scmp.eq.s32.totalorder %s17, 0
      %p85 = por %p83, %p84
      %p86 = scmp.ne.s32.totalorder %s72, %s73
      %p87 = scmp.eq.s32.totalorder %s18, 2
      %p88 = por %p86, %p87
      %p90 = scmp.ne.s32.totalorder %s73, %s89
      %p91 = scmp.eq.s32.totalorder %s18, 0
      %p92 = por %p90, %p91
      %s93 = ssub.s32 %s12, %s19
      %p94 = scmp.eq.s32.totalorder %s93, 0
      %s96 = sadd.s32 %s95, 1
      %s97 = scalar_select %p94, %s95, %s96
      %p100 = pneg %p94
      %p101 = scmp.eq.s32.totalorder %s12, 2
      %p102 = por %p100, %p101
      %p103 = scmp.ne.s32.totalorder %s95, %s98
      %p104 = scmp.eq.s32.totalorder %s12, 0
      %p105 = por %p103, %p104
      %p106 = scmp.ne.s32.totalorder %s95, %s98
      %p107 = scmp.eq.s32.totalorder %s17, 2
      %p108 = por %p106, %p107
      %p109 = scmp.ne.s32.totalorder %s98, %s99
      %p110 = scmp.eq.s32.totalorder %s17, 0
      %p111 = por %p109, %p110
      %p112 = scmp.ne.s32.totalorder %s98, %s99
      %p113 = scmp.eq.s32.totalorder %s18, 2
      %p114 = por %p112, %p113
      %p116 = scmp.ne.s32.totalorder %s99, %s115
      %p117 = scmp.eq.s32.totalorder %s18, 0
      %p118 = por %p116, %p117
      %p119 = scmp.le.s32.totalorder 1, %s12
      %p120 = scmp.lt.s32.totalorder %s12, 4
      %p121 = pnand %p119, %p120
      %p122 = pneg %p121
      // Predicated region
      $region9: #{blend_shapes.1} parent=5 // pred_check
        _
      $region10: #{blend_shapes.1} parent=5 // pred_check_branch
        %124 = sbr.rel (%p121) target = $region12
      $region11: #{blend_shapes.1} parent=5 // pred_region
        %s125 = ssub.s32 %s12, 1
        // Predicated region
        $region13: #{blend_shapes.1} parent=11 // pred_check
          %p126 = pneg %p33
        $region14: #{blend_shapes.1} parent=11 // pred_check_branch
          %128 = sbr.rel (%p126) target = $region16
        $region15: #{blend_shapes.1} parent=11 // pred_region
          _
        $region16: #{blend_shapes.1} parent=11 // pred_fallthru
          _
      $region12: #{blend_shapes.1} parent=5 // pred_fallthru
        _
      %p129 = scmp.lt.s32.totalorder %s12, 3
      // Predicated region
      $region17: #{blend_shapes.1} parent=5 // pred_check
        %p130 = pneg %p129
      $region18: #{blend_shapes.1} parent=5 // pred_check_branch
        %132 = sbr.rel (%p130) target = $region20
      $region19: #{blend_shapes.1} parent=5 // pred_region
        // Predicated region
        $region21: #{blend_shapes.1} parent=19 // pred_check
          %p133 = pneg %p53
        $region22: #{blend_shapes.1} parent=19 // pred_check_branch
          %135 = sbr.rel (%p133) target = $region24
        $region23: #{blend_shapes.1} parent=19 // pred_region
          %s136 = sand.u32 %s43, 1
          %s137 = scalar_lea.sflag [#allocation3], %s136
          %s138 = sand.u32 %s43, 1
          %s139 = smul.addr %s138, 32
          %s140 = scalar_lea.vmem [#allocation2], %s139
          %s141 = smul.u32 4, %s12
          %s143 = ssub.s32 512, 512
          %144 = vsyncadd %s137, %s143
          %s145 = smul.addr %s141, 64
          %s146 = scalar_lea.hbm %s1, %s145
          %s147 = sshll.u32 %s140, 4
          %s148 = int_to_ptr.vmem [resolvable:$true] %s147
          %153 = dma.hbm_to_vmem [thread:$0]  %s146, 512, %s148, %s137, 768, 256, 16
        $region24: #{blend_shapes.1} parent=19 // pred_fallthru
          _
        // Predicated region
        $region25: #{blend_shapes.1} parent=19 // pred_check
          %p154 = pneg %p79
        $region26: #{blend_shapes.1} parent=19 // pred_check_branch
          %156 = sbr.rel (%p154) target = $region28
        $region27: #{blend_shapes.1} parent=19 // pred_region
          %s157 = smul.u32 4, %s12
          %p158 = scmp.lt.s32.totalorder %s157, 11
          %s159 = scalar_select %p158, %s157, 11
          %s160 = scalar_lea.vmem %s2, %s159
          %s161 = smul.u32 4, %s12
        $region28: #{blend_shapes.1} parent=19 // pred_fallthru
          _
      $region20: #{blend_shapes.1} parent=5 // pred_fallthru
        _
      %p162 = scmp.le.s32.totalorder 1, %s12
      %p163 = scmp.lt.s32.totalorder %s12, 4
      %p164 = pnand %p162, %p163
      %p165 = pneg %p164
      // Predicated region
      $region29: #{blend_shapes.1} parent=5 // pred_check
        _
      $region30: #{blend_shapes.1} parent=5 // pred_check_branch
        %167 = sbr.rel (%p164) target = $region32
      $region31: #{blend_shapes.1} parent=5 // pred_region
        %s168 = ssub.s32 %s12, 1
        %s169 = sand.u32 %s46, 1
        %s170 = scalar_lea.sflag [#allocation3], %s169
        %s171 = sand.u32 %s46, 1
        %s172 = smul.addr %s171, 32
        %s173 = scalar_lea.vmem [#allocation2], %s172
        // Predicated region
        $region33: #{blend_shapes.1} parent=31 // pred_check
          %p174 = pneg %p59
        $region34: #{blend_shapes.1} parent=31 // pred_check_branch
          %176 = sbr.rel (%p174) target = $region36
        $region35: #{blend_shapes.1} parent=31 // pred_region
          %177 = dma.done %s170, 512
        $region36: #{blend_shapes.1} parent=31 // pred_fallthru
          _
        %p178 = pneg %p33
        %p179 = pneg %p30
        %s180 = sand.u32 %s46, 1
        %s181 = scalar_lea.sflag [#allocation3], %s180
        %s182 = sand.u32 %s46, 1
        %s183 = smul.addr %s182, 32
        %s184 = scalar_lea.vmem [#allocation2], %s183
        %p185 = pneg %p59
        %p186 = pneg %p56
        %s187 = smul.u32 4, %s17
        %p188 = scmp.lt.s32.totalorder %s187, 11
        %s189 = scalar_select %p188, %s187, 11
        %s190 = scalar_lea.vmem %s2, %s189
        %p191 = pneg %p85
        %p192 = pneg %p82
        %p193 = pneg %p111
        %p194 = pneg %p108
        %s195 = smul.u32 4, %s17
        %p196 = scmp.lt.s32.totalorder %s195, 11
        %s197 = scalar_select %p196, %s195, 11
        %s198 = smul.addr %s197, 8
        %s199 = scalar_lea.vmem %s3, %s198
        %s200 = smul.u32 4, %s17
        %s201 = smul.u32 4, %s17
        %p202 = scmp.lt.s32.totalorder %s201, 11
        %s203 = scalar_select %p202, %s201, 11
        %s204 = scalar_lea.vmem %s2, %s203
        %s205 = smul.u32 4, %s17
        %s206 = smul.u32 4, %s17
        %p207 = scmp.lt.s32.totalorder %s206, 11
        %s208 = scalar_select %p207, %s206, 11
        %s209 = smul.addr %s208, 8
        %s210 = scalar_lea.vmem %s3, %s209
        %s211 = smul.u32 4, %s17
        %v213 = vld [vmem:[%s0] sm:$0xf]
        %v214 = vld [vmem:[%s173] sm:$0xff]
        %v215 = vld [vmem:[%s173 + $0x8] sm:$0xff]
        %v216 = vld [vmem:[%s173 + $0x10] sm:$0xff]
        %v217 = vld [vmem:[%s173 + $0x18] sm:$0xff]
        %v218 = vld [vmem:[%s204] sm:$0xf]
        %v220 = vlaneseq
        %v221 = vshrl.u32 %v220, 7
        %v222 = vsub.s32 0, %v221
        %v223 = vrot.slane %v218, %v222
        %v224 = vlaneseq
        %v225 = vshrl.u32 %v224, 7
        %v226 = vsub.s32 1, %v225
        %v227 = vrot.slane %v218, %v226
        %v228 = vlaneseq
        %v229 = vshrl.u32 %v228, 7
        %v230 = vsub.s32 2, %v229
        %v231 = vrot.slane %v218, %v230
        %v232 = vlaneseq
        %v233 = vshrl.u32 %v232, 7
        %v234 = vsub.s32 3, %v233
        %v235 = vrot.slane %v218, %v234
        %v244 = vunpack.c.l.b16 %v214
        %v245 = vunpack.c.h.b16 %v214
        %v246 = vunpack.c.l.b16 %v215
        %v247 = vunpack.c.h.b16 %v215
        %v248 = vunpack.c.l.b16 %v216
        %v249 = vunpack.c.h.b16 %v216
        %v250 = vunpack.c.l.b16 %v217
        %v251 = vunpack.c.h.b16 %v217
        %v252 = vpack.c.b16 %v248, %v244
        %v253 = vpack.c.b16 %v249, %v245
        %v254 = vpack.c.b16 %v250, %v246
        %v255 = vpack.c.b16 %v251, %v247
        %vm260 = vcmask 130048
        %v262 = vsel %vm260, %v213, 0
        %264 = vmatprep.subr.bf16.mxu0 %v253
        %265 = vmatpush1.bf16.msra.mxu0 %v252
        %266 = vmatprep.subr.bf16.mxu0 0
        %267 = vmatpush1.bf16.msra.mxu0 0
        %268 = vmatprep.subr.bf16.mxu0 0
        %269 = vmatpush1.bf16.msra.mxu0 0
        %270 = vmatprep.subr.bf16.mxu0 0
        %271 = vmatpush1.bf16.msra.mxu0 0
        %272 = vmatprep.subr.bf16.mxu0 0
        %273 = vmatpush1.bf16.msra.mxu0 0
        %274 = vmatprep.subr.bf16.mxu0 0
        %275 = vmatpush1.bf16.msra.mxu0 0
        %276 = vmatprep.subr.bf16.mxu0 0
        %277 = vmatpush1.bf16.msra.mxu0 0
        %278 = vmatprep.subr.bf16.mxu0 0
        %279 = vmatpush1.bf16.msra.mxu0 0
        %280 = vmatprep.subr.bf16.mxu0 0
        %281 = vmatpush1.bf16.msra.mxu0 0
        %282 = vmatprep.subr.bf16.mxu0 0
        %283 = vmatpush1.bf16.msra.mxu0 0
        %284 = vmatprep.subr.bf16.mxu0 0
        %285 = vmatpush1.bf16.msra.mxu0 0
        %286 = vmatprep.subr.bf16.mxu0 0
        %287 = vmatpush1.bf16.msra.mxu0 0
        %288 = vmatprep.subr.bf16.mxu0 0
        %289 = vmatpush1.bf16.msra.mxu0 0
        %290 = vmatprep.subr.bf16.mxu0 0
        %291 = vmatpush1.bf16.msra.mxu0 0
        %292 = vmatprep.subr.bf16.mxu0 0
        %293 = vmatpush1.bf16.msra.mxu0 0
        %294 = vmatprep.subr.bf16.mxu0 0
        %295 = vmatpush1.bf16.msra.mxu0 0
        %296 = vmatprep.mubr.bf16.mxu0 0
        %297 = vmatmul.mubr.bf16.gmra.mrb[0].mxu0 %v262
        %v298 = vpop.f32.mrb[0].mxu0
        %v299 = vadd.f32 %v223, %v298
        %v300 = vpop.f32.mrb[0].mxu0
        %v301 = vadd.f32 %v227, %v300
        %v302 = vpop.f32.mrb[0].mxu0
        %v303 = vpop.f32.mrb[0].mxu0
        %304 = vdwg.mxu0
        %305 = vmatprep.subr.bf16.mxu0 %v255
        %306 = vmatpush1.bf16.msra.mxu0 %v254
        %307 = vmatprep.subr.bf16.mxu0 0
        %308 = vmatpush1.bf16.msra.mxu0 0
        %309 = vmatprep.subr.bf16.mxu0 0
        %310 = vmatpush1.bf16.msra.mxu0 0
        %311 = vmatprep.subr.bf16.mxu0 0
        %312 = vmatpush1.bf16.msra.mxu0 0
        %313 = vmatprep.subr.bf16.mxu0 0
        %314 = vmatpush1.bf16.msra.mxu0 0
        %315 = vmatprep.subr.bf16.mxu0 0
        %316 = vmatpush1.bf16.msra.mxu0 0
        %317 = vmatprep.subr.bf16.mxu0 0
        %318 = vmatpush1.bf16.msra.mxu0 0
        %319 = vmatprep.subr.bf16.mxu0 0
        %320 = vmatpush1.bf16.msra.mxu0 0
        %321 = vmatprep.subr.bf16.mxu0 0
        %322 = vmatpush1.bf16.msra.mxu0 0
        %323 = vmatprep.subr.bf16.mxu0 0
        %324 = vmatpush1.bf16.msra.mxu0 0
        %325 = vmatprep.subr.bf16.mxu0 0
        %326 = vmatpush1.bf16.msra.mxu0 0
        %327 = vmatprep.subr.bf16.mxu0 0
        %328 = vmatpush1.bf16.msra.mxu0 0
        %329 = vmatprep.subr.bf16.mxu0 0
        %330 = vmatpush1.bf16.msra.mxu0 0
        %331 = vmatprep.subr.bf16.mxu0 0
        %332 = vmatpush1.bf16.msra.mxu0 0
        %333 = vmatprep.subr.bf16.mxu0 0
        %334 = vmatpush1.bf16.msra.mxu0 0
        %335 = vmatprep.subr.bf16.mxu0 0
        %336 = vmatpush1.bf16.msra.mxu0 0
        %337 = vmatprep.mubr.bf16.mxu0 0
        %338 = vmatmul.mubr.bf16.gmra.mrb[0].mxu0 %v262
        %v339 = vpop.f32.mrb[0].mxu0
        %v340 = vadd.f32 %v231, %v339
        %v341 = vpop.f32.mrb[0].mxu0
        %v342 = vadd.f32 %v235, %v341
        %v343 = vpop.f32.mrb[0].mxu0
        %v344 = vpop.f32.mrb[0].mxu0
        %345 = vdwg.mxu0
        %346 = vst [vmem:[%s210] sm:$0xff] %v299
        %347 = vst [vmem:[%s210 + $0x8] sm:$0xff] %v301
        %348 = vst [vmem:[%s210 + $0x10] sm:$0xff] %v340
        %349 = vst [vmem:[%s210 + $0x18] sm:$0xff] %v342
        %s350 = smul.u32 4, %s17
        %p351 = scmp.lt.s32.totalorder %s350, 11
        %s352 = scalar_select %p351, %s350, 11
        %s353 = smul.addr %s352, 8
        %s354 = scalar_lea.vmem %s3, %s353
        // Predicated region
        $region37: #{blend_shapes.1} parent=31 // pred_check
          %p355 = pneg %p108
        $region38: #{blend_shapes.1} parent=31 // pred_check_branch
          %357 = sbr.rel (%p355) target = $region40
        $region39: #{blend_shapes.1} parent=31 // pred_region
          %s358 = smul.u32 4, %s17
        $region40: #{blend_shapes.1} parent=31 // pred_fallthru
          _
      $region32: #{blend_shapes.1} parent=5 // pred_fallthru
        _
      %p359 = scmp.le.s32.totalorder 2, %s12
      // Predicated region
      $region41: #{blend_shapes.1} parent=5 // pred_check
        %p360 = pneg %p359
      $region42: #{blend_shapes.1} parent=5 // pred_check_branch
        %362 = sbr.rel (%p360) target = $region44
      $region43: #{blend_shapes.1} parent=5 // pred_region
        %s363 = ssub.s32 %s12, 2
        // Predicated region
        $region45: #{blend_shapes.1} parent=43 // pred_check
          %p364 = pneg %p114
        $region46: #{blend_shapes.1} parent=43 // pred_check_branch
          %366 = sbr.rel (%p364) target = $region48
        $region47: #{blend_shapes.1} parent=43 // pred_region
          %s367 = smul.u32 4, %s18
          %p368 = scmp.lt.s32.totalorder %s367, 11
          %s369 = scalar_select %p368, %s367, 11
          %s370 = smul.addr %s369, 8
          %s371 = scalar_lea.vmem %s3, %s370
        $region48: #{blend_shapes.1} parent=43 // pred_fallthru
          _
      $region44: #{blend_shapes.1} parent=5 // pred_fallthru
        _
    $region6: #{blend_shapes.1} parent=1 // loop_footer
      %s16 = sadd.s32 1, %s12
    $region7: #{blend_shapes.1} parent=1 // loop_footer_branch
      %11 = sbr.rel target = $region3
    $region8: #{blend_shapes.1} parent=1 // loop_exit
      _
    %372 = vsyncpa [#allocation3], 1
    %s373 = scalar_lea.sflag [#allocation3], 1
    %374 = vsyncpa %s373, 1

</llo_original>
